<compile_context>
chip_gen: v5e
topology: v5e:2x2
jax: 0.10.0
libtpu: 0.0.40
codegen_flags: <defaults>
</compile_context>

<pallas_src>
import math

import numpy as np
import jax
import jax.numpy as jnp
from jax.experimental import pallas as pl
from jax.experimental.pallas import tpu as pltpu

LANE = 128
SUBLANE = 8


def _round_up(x, m):
    return ((x + m - 1) // m) * m


def _cdiv(a, b):
    return -(-a // b)


def make_mlp_kernel(num_layers, d_pad, out_dim):
    """Fused MLP forward kernel.

    Hidden width is zero-padded to d_pad (multiple of 128); the output layer
    is computed lane-padded but only the first `out_dim` logits are stored
    (compact HBM writeback).
    """

    def kernel(*refs):
        if num_layers > 0:
            x_ref, w0_ref, wh_ref, wo_ref, b_ref, o_ref = refs
        else:
            x_ref, w0_ref, wo_ref, b_ref, o_ref = refs
            wh_ref = None

        # Layer 0: (TB, in_dim) @ (in_dim, d_pad) + b0 -> ReLU
        h = jnp.dot(x_ref[...], w0_ref[...], preferred_element_type=jnp.float32)
        h = jnp.maximum(h + b_ref[0:1, 0:d_pad], 0.0).astype(x_ref.dtype)

        # Hidden layers (static Python loop -> fully unrolled at trace time).
        for l in range(num_layers):
            h = jnp.dot(h, wh_ref[l], preferred_element_type=jnp.float32)
            h = jnp.maximum(h + b_ref[l + 1:l + 2, 0:d_pad], 0.0).astype(x_ref.dtype)

        # Output layer: lane-padded matmul, compact (tb, out_dim) store.
        out = jnp.dot(h, wo_ref[...], preferred_element_type=jnp.float32)
        out = out[:, 0:out_dim] + b_ref[num_layers + 1:num_layers + 2, 0:out_dim]
        o_ref[...] = out.astype(o_ref.dtype)

    return kernel


def init_params(key, state_shape, action_shape, layer_dim=None, num_layers=2):
    """Deterministic parameter init matching MLPNet's layer shapes.

    Weights are stored as (in, out), i.e. transposed vs. PyTorch's (out, in),
    so the kernel computes x @ W directly.  Init bound matches torch.nn.Linear.
    """
    in_dim = int(np.prod(state_shape))
    out_dim = int(np.prod(action_shape))
    if layer_dim is None:
        layer_dim = pow(2, math.floor(math.log2(max(in_dim, out_dim))))

    dims = [in_dim] + [layer_dim] * (num_layers + 1) + [out_dim]
    params = []
    for d_in, d_out in zip(dims[:-1], dims[1:]):
        key, kw, kb = jax.random.split(key, 3)
        bound = 1.0 / math.sqrt(d_in)
        w = jax.random.uniform(kw, (d_in, d_out), jnp.float32, -bound, bound)
        b = jax.random.uniform(kb, (1, d_out), jnp.float32, -bound, bound)
        params.append((w, b))
    return params, in_dim, out_dim, layer_dim


def pack_params(params, in_dim, layer_dim, out_dim, num_layers,
                compute_dtype=jnp.bfloat16):
    """Zero-pad widths to 128 lanes and pack into few, lane-dense arrays.

    Weights/x are cast to `compute_dtype` (bf16 by default for inference);
    biases stay f32 (added after the f32-accumulated dot).
    """
    d_pad = _round_up(layer_dim, LANE)
    out_pad = _round_up(out_dim, LANE)
    p = max(d_pad, out_pad)

    (w0, b0), hidden, (wo, bo) = params[0], params[1:-1], params[-1]
    assert len(hidden) == num_layers

    w0_p = jnp.zeros((in_dim, d_pad), jnp.float32).at[:, :layer_dim].set(w0)
    wo_p = jnp.zeros((d_pad, out_pad), jnp.float32).at[:layer_dim, :out_dim].set(wo)

    b_all = jnp.zeros((num_layers + 2, p), jnp.float32)
    b_all = b_all.at[0, :layer_dim].set(b0[0])
    for l, (_, b) in enumerate(hidden):
        b_all = b_all.at[l + 1, :layer_dim].set(b[0])
    b_all = b_all.at[num_layers + 1, :out_dim].set(bo[0])

    packed = {
        "w0": w0_p.astype(compute_dtype),
        "wo": wo_p.astype(compute_dtype),
        "b": b_all,                # biases stay f32
        "d_pad": d_pad,
        "out_pad": out_pad,
    }
    if num_layers > 0:
        wh = jnp.zeros((num_layers, d_pad, d_pad), jnp.float32)
        for l, (w, _) in enumerate(hidden):
            wh = wh.at[l, :layer_dim, :layer_dim].set(w)
        packed["wh"] = wh.astype(compute_dtype)
    return packed


def mlp_net_forward(obs, packed, in_dim, out_dim, num_layers, state=None,
                    batch_tile=1024):
    """Equivalent of MLPNet.forward: returns (logits, state).

    Compute dtype is taken from the packed weights (bf16 by default).
    """
    compute_dtype = packed["w0"].dtype
    obs = jnp.asarray(obs, jnp.float32)
    batch = obs.shape[0]
    x = obs.reshape(batch, -1)
    assert x.shape[1] == in_dim

    d_pad, out_pad = packed["d_pad"], packed["out_pad"]
    p = max(d_pad, out_pad)

    # --- batch tiling --------------------------------------------------------
    # bf16 packs two rows per 32-bit sublane -> keep tiles a multiple of 16.
    gran = 16 if jnp.dtype(compute_dtype).itemsize == 2 else SUBLANE
    b_min = _round_up(batch, gran)
    tb = min(batch_tile, b_min)
    num_tiles = _cdiv(b_min, tb)
    # v7x megacore: "parallel" only splits work across the 2 TensorCores if
    # the grid has >= 2 steps; force that whenever the batch allows.
    if num_tiles < 2 and b_min >= 2 * gran:
        num_tiles = 2
    # Balance tiles (keeps padding waste < gran per tile instead of up to tb).
    tb = _round_up(_cdiv(b_min, num_tiles), gran)
    b_pad = tb * num_tiles

    if b_pad != batch:
        x = jnp.pad(x, ((0, b_pad - batch), (0, 0)))
    x = x.astype(compute_dtype)

    grid = (num_tiles,)

    in_specs = [
        pl.BlockSpec((tb, in_dim), lambda i: (i, 0)),          # x: tiled on batch
        pl.BlockSpec((in_dim, d_pad), lambda i: (0, 0)),       # w0: VMEM-resident
    ]
    args = [x, packed["w0"]]
    if num_layers > 0:
        in_specs.append(
            pl.BlockSpec((num_layers, d_pad, d_pad), lambda i: (0, 0, 0)))
        args.append(packed["wh"])
    in_specs += [
        pl.BlockSpec((d_pad, out_pad), lambda i: (0, 0)),      # w_out
        pl.BlockSpec((num_layers + 2, p), lambda i: (0, 0)),   # packed biases (f32)
    ]
    args += [packed["wo"], packed["b"]]

    dsize = jnp.dtype(compute_dtype).itemsize
    weight_bytes = int((packed["w0"].size + packed["wo"].size
                        + (packed["wh"].size if num_layers > 0 else 0)) * dsize
                       + packed["b"].size * 4)
    flops = int(2 * b_pad * (in_dim * d_pad + num_layers * d_pad * d_pad
                             + d_pad * out_pad))
    bytes_accessed = int(b_pad * in_dim * dsize + weight_bytes
                         + b_pad * out_dim * 4)

    # Scoped-VMEM budget: double-buffered x/out tiles + resident weights
    # (x2 for their pipeline buffers) + f32 intermediates.  Raised above v5e's
    # 16 MiB default; capped at 64 MiB (v7x physical VMEM).
    vmem_needed = (2 * tb * in_dim * dsize + 2 * tb * out_dim * 4
                   + 2 * weight_bytes + 4 * tb * d_pad * 4)
    vmem_limit = int(min(64 * 2**20, max(32 * 2**20, 2 * vmem_needed)))

    out_compact = pl.pallas_call(
        make_mlp_kernel(num_layers, d_pad, out_dim),
        out_shape=jax.ShapeDtypeStruct((b_pad, out_dim), jnp.float32),
        grid=grid,
        in_specs=in_specs,
        out_specs=pl.BlockSpec((tb, out_dim), lambda i: (i, 0)),
        compiler_params=pltpu.CompilerParams(
            dimension_semantics=("parallel",),
            vmem_limit_bytes=vmem_limit),
        cost_estimate=pl.CostEstimate(flops=flops, transcendentals=0,
                                      bytes_accessed=bytes_accessed),
    )(*args)

    logits = out_compact[:batch]
    return logits, state


if __name__ == "__main__":
    key = jax.random.PRNGKey(0)

    # Small shapes consistent with the module's forward:
    # state_shape=(4,16) -> in_features=64, action_shape=(8,) -> 8 logits,
    # layer_dim = 2^floor(log2(64)) = 64, num_layers=2 (4 Linear layers total).
    state_shape = (4, 16)
    action_shape = (8,)
    batch = 2
    num_layers = 2

    k_param, k_obs = jax.random.split(key)
    params, in_dim, out_dim, layer_dim = init_params(
        k_param, state_shape, action_shape, layer_dim=None, num_layers=num_layers)
    obs = jax.random.normal(k_obs, (batch,) + state_shape, dtype=jnp.float32)

    # Pure-JAX reference of the PyTorch forward (unpadded f32 params).
    x_ref = obs.reshape(batch, -1)
    ref = x_ref
    for i, (w, b) in enumerate(params):
        ref = ref @ w + b
        if i < len(params) - 1:
            ref = jnp.maximum(ref, 0.0)

    # f32 path: padding is exact math -> tight tolerance.
    packed_f32 = pack_params(params, in_dim, layer_dim, out_dim, num_layers,
                             compute_dtype=jnp.float32)
    logits_f32, st = mlp_net_forward(obs, packed_f32, in_dim, out_dim,
                                     num_layers, state=None)
    logits_f32 = jax.block_until_ready(logits_f32)
    assert logits_f32.shape == (batch, out_dim)
    assert st is None
    assert bool(jnp.allclose(logits_f32, ref, atol=1e-5, rtol=1e-5)), \
        float(jnp.max(jnp.abs(logits_f32 - ref)))

    # bf16 path (default inference config): bf16 weights/activations with f32
    # accumulation -> loose tolerance.
    packed_bf16 = pack_params(params, in_dim, layer_dim, out_dim, num_layers)
    logits_bf16, _ = mlp_net_forward(obs, packed_bf16, in_dim, out_dim,
                                     num_layers, state=None)
    logits_bf16 = jax.block_until_ready(logits_bf16)
    assert logits_bf16.shape == (batch, out_dim)
    assert bool(jnp.allclose(logits_bf16, ref, atol=5e-2, rtol=5e-2)), \
        float(jnp.max(jnp.abs(logits_bf16 - ref)))

    print("KERNEL_OK")
</pallas_src>

<mosaic_0001>
module attributes {stable_mosaic.version = 11 : i64} {
  func.func @kernel(%arg0: i32, %arg1: memref<8x64xf32, #tpu.memory_space<vmem>>, %arg2: memref<64x128xf32, #tpu.memory_space<vmem>>, %arg3: memref<2x128x128xf32, #tpu.memory_space<vmem>>, %arg4: memref<128x128xf32, #tpu.memory_space<vmem>>, %arg5: memref<4x128xf32, #tpu.memory_space<vmem>>, %arg6: memref<8x8xf32, #tpu.memory_space<vmem>>) attributes {dimension_semantics = [#tpu.dimension_semantics<parallel>], iteration_bounds = array<i64: 1>, scalar_prefetch = 0 : i64, scratch_operands = 0 : i64, tpu.core_type = #tpu.core_type<tc>, window_params = [{transform_indices = @transform_0, window_bounds = array<i64: 8, 64>}, {pipeline_mode = #tpu.pipeline_mode<synchronous>, transform_indices = @transform_1, window_bounds = array<i64: 64, 128>}, {pipeline_mode = #tpu.pipeline_mode<synchronous>, transform_indices = @transform_2, window_bounds = array<i64: 2, 128, 128>}, {pipeline_mode = #tpu.pipeline_mode<synchronous>, transform_indices = @transform_3, window_bounds = array<i64: 128, 128>}, {pipeline_mode = #tpu.pipeline_mode<synchronous>, transform_indices = @transform_4, window_bounds = array<i64: 4, 128>}, {transform_indices = @transform_5, window_bounds = array<i64: 8, 8>}]} {
    %c0 = arith.constant 0 : index
    %c0_0 = arith.constant 0 : index
    %0 = vector.load %arg1[%c0, %c0_0] : memref<8x64xf32, #tpu.memory_space<vmem>>, vector<8x64xf32>
    %c0_1 = arith.constant 0 : index
    %c0_2 = arith.constant 0 : index
    %1 = vector.load %arg2[%c0_1, %c0_2] : memref<64x128xf32, #tpu.memory_space<vmem>>, vector<64x128xf32>
    %cst = arith.constant dense<0.000000e+00> : vector<8x128xf32>
    %2 = tpu.matmul %0, %1, %cst {dimension_numbers = #tpu.dot_dimension_numbers<[1], [0], [0], [1], [0, 0, 1, 1], [], []>} : vector<8x64xf32>, vector<64x128xf32>, vector<8x128xf32> -> vector<8x128xf32>
    %c0_3 = arith.constant 0 : index
    %c0_4 = arith.constant 0 : index
    %3 = vector.load %arg5[%c0_3, %c0_4] : memref<4x128xf32, #tpu.memory_space<vmem>>, vector<1x128xf32>
    %4 = vector.broadcast %3 : vector<1x128xf32> to vector<8x128xf32>
    %5 = arith.addf %2, %4 : vector<8x128xf32>
    %cst_5 = arith.constant 0.000000e+00 : f32
    %6 = vector.broadcast %cst_5 : f32 to vector<8x128xf32>
    %7 = arith.maximumf %5, %6 : vector<8x128xf32>
    %c0_6 = arith.constant 0 : index
    %c0_7 = arith.constant 0 : index
    %c0_8 = arith.constant 0 : index
    %8 = vector.load %arg3[%c0_6, %c0_7, %c0_8] : memref<2x128x128xf32, #tpu.memory_space<vmem>>, vector<1x128x128xf32>
    %9 = vector.shape_cast %8 : vector<1x128x128xf32> to vector<128x128xf32>
    %cst_9 = arith.constant dense<0.000000e+00> : vector<8x128xf32>
    %10 = tpu.matmul %7, %9, %cst_9 {dimension_numbers = #tpu.dot_dimension_numbers<[1], [0], [0], [1], [0, 0, 1, 1], [], []>} : vector<8x128xf32>, vector<128x128xf32>, vector<8x128xf32> -> vector<8x128xf32>
    %c1 = arith.constant 1 : index
    %c0_10 = arith.constant 0 : index
    %11 = vector.load %arg5[%c1, %c0_10] : memref<4x128xf32, #tpu.memory_space<vmem>>, vector<1x128xf32>
    %12 = vector.broadcast %11 : vector<1x128xf32> to vector<8x128xf32>
    %13 = arith.addf %10, %12 : vector<8x128xf32>
    %cst_11 = arith.constant 0.000000e+00 : f32
    %14 = vector.broadcast %cst_11 : f32 to vector<8x128xf32>
    %15 = arith.maximumf %13, %14 : vector<8x128xf32>
    %c1_12 = arith.constant 1 : index
    %c0_13 = arith.constant 0 : index
    %c0_14 = arith.constant 0 : index
    %16 = vector.load %arg3[%c1_12, %c0_13, %c0_14] : memref<2x128x128xf32, #tpu.memory_space<vmem>>, vector<1x128x128xf32>
    %17 = vector.shape_cast %16 : vector<1x128x128xf32> to vector<128x128xf32>
    %cst_15 = arith.constant dense<0.000000e+00> : vector<8x128xf32>
    %18 = tpu.matmul %15, %17, %cst_15 {dimension_numbers = #tpu.dot_dimension_numbers<[1], [0], [0], [1], [0, 0, 1, 1], [], []>} : vector<8x128xf32>, vector<128x128xf32>, vector<8x128xf32> -> vector<8x128xf32>
    %c2 = arith.constant 2 : index
    %c0_16 = arith.constant 0 : index
    %19 = vector.load %arg5[%c2, %c0_16] : memref<4x128xf32, #tpu.memory_space<vmem>>, vector<1x128xf32>
    %20 = vector.broadcast %19 : vector<1x128xf32> to vector<8x128xf32>
    %21 = arith.addf %18, %20 : vector<8x128xf32>
    %cst_17 = arith.constant 0.000000e+00 : f32
    %22 = vector.broadcast %cst_17 : f32 to vector<8x128xf32>
    %23 = arith.maximumf %21, %22 : vector<8x128xf32>
    %c0_18 = arith.constant 0 : index
    %c0_19 = arith.constant 0 : index
    %24 = vector.load %arg4[%c0_18, %c0_19] : memref<128x128xf32, #tpu.memory_space<vmem>>, vector<128x128xf32>
    %cst_20 = arith.constant dense<0.000000e+00> : vector<8x128xf32>
    %25 = tpu.matmul %23, %24, %cst_20 {dimension_numbers = #tpu.dot_dimension_numbers<[1], [0], [0], [1], [0, 0, 1, 1], [], []>} : vector<8x128xf32>, vector<128x128xf32>, vector<8x128xf32> -> vector<8x128xf32>
    %26 = vector.extract_strided_slice %25 {offsets = [0, 0], sizes = [8, 8], strides = [1, 1]} : vector<8x128xf32> to vector<8x8xf32>
    %c3 = arith.constant 3 : index
    %c0_21 = arith.constant 0 : index
    %27 = vector.load %arg5[%c3, %c0_21] : memref<4x128xf32, #tpu.memory_space<vmem>>, vector<1x8xf32>
    %28 = vector.broadcast %27 : vector<1x8xf32> to vector<8x8xf32>
    %29 = arith.addf %26, %28 : vector<8x8xf32>
    %c0_22 = arith.constant 0 : index
    %c0_23 = arith.constant 0 : index
    %30 = vector.load %arg6[%c0_22, %c0_23] : memref<8x8xf32, #tpu.memory_space<vmem>>, vector<8x8xf32>
    tpu.vector_store %arg6[%c0_22, %c0_23], %29 {strides = array<i32>} : memref<8x8xf32, #tpu.memory_space<vmem>>, vector<8x8xf32>,
    return
  }
  func.func @transform_0(%arg0: i32) -> (i32, i32) {
    %c0_i32 = arith.constant 0 : i32
    %c0_i32_0 = arith.constant 0 : i32
    return %arg0, %c0_i32 : i32, i32
  }
  func.func @transform_1(%arg0: i32) -> (i32, i32) {
    %c0_i32 = arith.constant 0 : i32
    %c0_i32_0 = arith.constant 0 : i32
    %c0_i32_1 = arith.constant 0 : i32
    return %c0_i32, %c0_i32_0 : i32, i32
  }
  func.func @transform_2(%arg0: i32) -> (i32, i32, i32) {
    %c0_i32 = arith.constant 0 : i32
    %c0_i32_0 = arith.constant 0 : i32
    %c0_i32_1 = arith.constant 0 : i32
    %c0_i32_2 = arith.constant 0 : i32
    return %c0_i32, %c0_i32_0, %c0_i32_1 : i32, i32, i32
  }
  func.func @transform_3(%arg0: i32) -> (i32, i32) {
    %c0_i32 = arith.constant 0 : i32
    %c0_i32_0 = arith.constant 0 : i32
    %c0_i32_1 = arith.constant 0 : i32
    return %c0_i32, %c0_i32_0 : i32, i32
  }
  func.func @transform_4(%arg0: i32) -> (i32, i32) {
    %c0_i32 = arith.constant 0 : i32
    %c0_i32_0 = arith.constant 0 : i32
    %c0_i32_1 = arith.constant 0 : i32
    return %c0_i32, %c0_i32_0 : i32, i32
  }
  func.func @transform_5(%arg0: i32) -> (i32, i32) {
    %c0_i32 = arith.constant 0 : i32
    %c0_i32_0 = arith.constant 0 : i32
    return %arg0, %c0_i32 : i32, i32
  }
}

</mosaic_0001>

<llo_original>
// kernel: tpu_custom_call.1
$region0: #{tpu_custom_call.1}
  #allocation0 [shape = 'u32[]', space=smem, size = 0x4, offset = 0x4, fixed_abs, tag = 'smem constant byte address 0x4 - core index']
  #allocation1 [shape = 'u32[72,128]{1,0:T(1,128)}', space=vmem, size = 0x9000, scoped, tag = 'internal scratch']
  %s0 = inlined_call_operand.hbm [shape: f32[8,64], index: 0, kind: input, shape index: {}]
  %s1 = inlined_call_operand.hbm [shape: f32[64,128], index: 1, kind: input, shape index: {}]
  %s2 = inlined_call_operand.hbm [shape: f32[2,128,128], index: 2, kind: input, shape index: {}]
  %s3 = inlined_call_operand.hbm [shape: f32[128,128], index: 3, kind: input, shape index: {}]
  %s4 = inlined_call_operand.hbm [shape: f32[4,128], index: 4, kind: input, shape index: {}]
  %s5 = inlined_call_operand.hbm [shape: f32[8,8], index: 5, kind: output, shape index: {}]
  %s6 = sld [smem:[#allocation0]]
  $region50: #{tpu_custom_call.1} parent=0
    _
  %s8 = ssub.s32 1, %s6
  %s9 = scalar_select 0, %s8, %s6
  $region1: #{tpu_custom_call.1} parent=0
    #allocation2 [shape = 'u8[4096]{0}', space=vmem, size = 0x1000, scoped, tag = 'input window, operand 0, single buffered']
    #allocation3 [shape = 's32[1]{0}', space=sflag, size = 0x4, scoped, tag = 'scoped memory for tpu_custom_call.1']
    #allocation4 [shape = 's32[1]{0}', space=sflag, size = 0x4, scoped, tag = 'scoped memory for tpu_custom_call.1']
    #allocation5 [shape = 'u8[32768]{0}', space=vmem, size = 0x8000, scoped, tag = 'input window, operand 1, single buffered']
    #allocation6 [shape = 's32[1]{0}', space=sflag, size = 0x4, scoped, tag = 'scoped memory for tpu_custom_call.1']
    #allocation7 [shape = 'u8[131072]{0}', space=vmem, size = 0x20000, scoped, tag = 'input window, operand 2, single buffered']
    #allocation8 [shape = 'u8[65536]{0}', space=vmem, size = 0x10000, scoped, tag = 'input window, operand 3, single buffered']
    #allocation9 [shape = 's32[1]{0}', space=sflag, size = 0x4, scoped, tag = 'scoped memory for tpu_custom_call.1']
    #allocation10 [shape = 'u8[2048]{0}', space=vmem, size = 0x800, scoped, tag = 'input window, operand 4, single buffered']
    #allocation11 [shape = 'u8[4096]{0}', space=vmem, size = 0x1000, scoped, tag = 'output window, operand 0, single buffered']
    %10 = vsyncpa [#allocation3], 0
    %11 = vsyncpa [#allocation6], 0
    %12 = vsyncpa [#allocation9], 0
    %13 = vsyncpa [#allocation4], 0
    // Predicated region
    $region2: #{tpu_custom_call.1} parent=1 // pred_check
      _
    $region3: #{tpu_custom_call.1} parent=1 // pred_check_branch
      %15 = sbr.rel (0) target = $region5
    $region4: #{tpu_custom_call.1} parent=1 // pred_region
      %17 = vsyncadd [#allocation3], 0
      %s19 = sshll.u32 %s0, 4
      %s20 = int_to_ptr.hbm [resolvable:$true] %s19
      %s21 = sshll.u32 [#allocation2], 4
      %s22 = int_to_ptr.vmem [resolvable:$true] %s21
      %24 = dma.hbm_to_vmem [thread:$0]  %s20, 128, %s22, [#allocation3]
    $region5: #{tpu_custom_call.1} parent=1 // pred_fallthru
      _
    // Predicated region
    $region6: #{tpu_custom_call.1} parent=1 // pred_check
      _
    $region7: #{tpu_custom_call.1} parent=1 // pred_check_branch
      %26 = sbr.rel (0) target = $region9
    $region8: #{tpu_custom_call.1} parent=1 // pred_region
      %28 = vsyncadd [#allocation6], 0
      %s29 = sshll.u32 %s1, 4
      %s30 = int_to_ptr.hbm [resolvable:$true] %s29
      %s31 = sshll.u32 [#allocation5], 4
      %s32 = int_to_ptr.vmem [resolvable:$true] %s31
      %37 = dma.hbm_to_vmem [thread:$0]  %s30, 1024, %s32, [#allocation6], 128, 128, 8
    $region9: #{tpu_custom_call.1} parent=1 // pred_fallthru
      _
    // Predicated region
    $region10: #{tpu_custom_call.1} parent=1 // pred_check
      _
    $region11: #{tpu_custom_call.1} parent=1 // pred_check_branch
      %39 = sbr.rel (0) target = $region13
    $region12: #{tpu_custom_call.1} parent=1 // pred_region
      %41 = vsyncadd [#allocation6], 0
      %s42 = sshll.u32 %s2, 4
      %s43 = int_to_ptr.hbm [resolvable:$true] %s42
      %s44 = sshll.u32 [#allocation7], 4
      %s45 = int_to_ptr.vmem [resolvable:$true] %s44
      %50 = dma.hbm_to_vmem [thread:$0]  %s43, 4096, %s45, [#allocation6], 128, 128, 8
    $region13: #{tpu_custom_call.1} parent=1 // pred_fallthru
      _
    // Predicated region
    $region14: #{tpu_custom_call.1} parent=1 // pred_check
      _
    $region15: #{tpu_custom_call.1} parent=1 // pred_check_branch
      %52 = sbr.rel (0) target = $region17
    $region16: #{tpu_custom_call.1} parent=1 // pred_region
      %54 = vsyncadd [#allocation9], 0
      %s55 = sshll.u32 %s3, 4
      %s56 = int_to_ptr.hbm [resolvable:$true] %s55
      %s57 = sshll.u32 [#allocation8], 4
      %s58 = int_to_ptr.vmem [resolvable:$true] %s57
      %63 = dma.hbm_to_vmem [thread:$0]  %s56, 2048, %s58, [#allocation9], 128, 128, 8
    $region17: #{tpu_custom_call.1} parent=1 // pred_fallthru
      _
    // Predicated region
    $region18: #{tpu_custom_call.1} parent=1 // pred_check
      _
    $region19: #{tpu_custom_call.1} parent=1 // pred_check_branch
      %65 = sbr.rel (0) target = $region21
    $region20: #{tpu_custom_call.1} parent=1 // pred_region
      %67 = vsyncadd [#allocation9], 0
      %s69 = sshll.u32 %s4, 4
      %s70 = int_to_ptr.hbm [resolvable:$true] %s69
      %s71 = sshll.u32 [#allocation10], 4
      %s72 = int_to_ptr.vmem [resolvable:$true] %s71
      %74 = dma.hbm_to_vmem [thread:$0]  %s70, 64, %s72, [#allocation9]
    $region21: #{tpu_custom_call.1} parent=1 // pred_fallthru
      _
    // Predicated region
    $region22: #{tpu_custom_call.1} parent=1 // pred_check
      _
    $region23: #{tpu_custom_call.1} parent=1 // pred_check_branch
      %76 = sbr.rel (0) target = $region25
    $region24: #{tpu_custom_call.1} parent=1 // pred_region
      %78 = dma.done [#allocation3], 128
    $region25: #{tpu_custom_call.1} parent=1 // pred_fallthru
      _
    // Predicated region
    $region26: #{tpu_custom_call.1} parent=1 // pred_check
      _
    $region27: #{tpu_custom_call.1} parent=1 // pred_check_branch
      %80 = sbr.rel (0) target = $region29
    $region28: #{tpu_custom_call.1} parent=1 // pred_region
      %82 = dma.done [#allocation6], 1024
    $region29: #{tpu_custom_call.1} parent=1 // pred_fallthru
      _
    // Predicated region
    $region30: #{tpu_custom_call.1} parent=1 // pred_check
      _
    $region31: #{tpu_custom_call.1} parent=1 // pred_check_branch
      %84 = sbr.rel (0) target = $region33
    $region32: #{tpu_custom_call.1} parent=1 // pred_region
      %86 = dma.done [#allocation6], 4096
    $region33: #{tpu_custom_call.1} parent=1 // pred_fallthru
      _
    // Predicated region
    $region34: #{tpu_custom_call.1} parent=1 // pred_check
      _
    $region35: #{tpu_custom_call.1} parent=1 // pred_check_branch
      %88 = sbr.rel (0) target = $region37
    $region36: #{tpu_custom_call.1} parent=1 // pred_region
      %90 = dma.done [#allocation9], 2048
    $region37: #{tpu_custom_call.1} parent=1 // pred_fallthru
      _
    // Predicated region
    $region38: #{tpu_custom_call.1} parent=1 // pred_check
      _
    $region39: #{tpu_custom_call.1} parent=1 // pred_check_branch
      %92 = sbr.rel (0) target = $region41
    $region40: #{tpu_custom_call.1} parent=1 // pred_region
      %94 = dma.done [#allocation9], 64
    $region41: #{tpu_custom_call.1} parent=1 // pred_fallthru
      _
    %v95 = vld [vmem:[#allocation2] sm:$0xff]
    %v96 = vld [vmem:[#allocation5] sm:$0xff]
    %v97 = vld [vmem:[#allocation5 + $0x8] sm:$0xff]
    %v98 = vld [vmem:[#allocation5 + $0x10] sm:$0xff]
    %v99 = vld [vmem:[#allocation5 + $0x18] sm:$0xff]
    %v100 = vld [vmem:[#allocation5 + $0x20] sm:$0xff]
    %v101 = vld [vmem:[#allocation5 + $0x28] sm:$0xff]
    %v102 = vld [vmem:[#allocation5 + $0x30] sm:$0xff]
    %v103 = vld [vmem:[#allocation5 + $0x38] sm:$0xff]
    %v104 = vld [vmem:[#allocation10] sm:$0x1]
    %v105 = vperm.slane %v104, 0
    %vm106 = vcmask 523264
    %v108 = vsel %vm106, %v95, 0
    %110 = vmatpush.msra.mxu0 0.0
    %111 = vmatpush.msra.mxu0 0.0
    %112 = vmatpush.msra.mxu0 0.0
    %113 = vmatpush.msra.mxu0 0.0
    %114 = vmatpush.msra.mxu0 0.0
    %115 = vmatpush.msra.mxu0 0.0
    %116 = vmatpush.msra.mxu0 0.0
    %117 = vmatpush.msra.mxu0 0.0
    %118 = vmatpush.msra.mxu0 %v103
    %119 = vmatpush.msra.mxu0 %v102
    %120 = vmatpush.msra.mxu0 %v101
    %121 = vmatpush.msra.mxu0 %v100
    %122 = vmatpush.msra.mxu0 %v99
    %123 = vmatpush.msra.mxu0 %v98
    %124 = vmatpush.msra.mxu0 %v97
    %125 = vmatpush.msra.mxu0 %v96
    %126 = vmatmul.f32.gmra.mxu0 %v108
    %v127 = vpop.f32.mrf.mxu0
    %v128 = vadd.f32 %v105, %v127
    %129 = vdwg.mxu0
    %v130 = vmax.f32 %v128, 0.0
    %v131 = vld [vmem:[#allocation7] sm:$0xff]
    %v132 = vld [vmem:[#allocation7 + $0x8] sm:$0xff]
    %v133 = vld [vmem:[#allocation7 + $0x10] sm:$0xff]
    %v134 = vld [vmem:[#allocation7 + $0x18] sm:$0xff]
    %v135 = vld [vmem:[#allocation7 + $0x20] sm:$0xff]
    %v136 = vld [vmem:[#allocation7 + $0x28] sm:$0xff]
    %v137 = vld [vmem:[#allocation7 + $0x30] sm:$0xff]
    %v138 = vld [vmem:[#allocation7 + $0x38] sm:$0xff]
    %v139 = vld [vmem:[#allocation7 + $0x40] sm:$0xff]
    %v140 = vld [vmem:[#allocation7 + $0x48] sm:$0xff]
    %v141 = vld [vmem:[#allocation7 + $0x50] sm:$0xff]
    %v142 = vld [vmem:[#allocation7 + $0x58] sm:$0xff]
    %v143 = vld [vmem:[#allocation7 + $0x60] sm:$0xff]
    %v144 = vld [vmem:[#allocation7 + $0x68] sm:$0xff]
    %v145 = vld [vmem:[#allocation7 + $0x70] sm:$0xff]
    %v146 = vld [vmem:[#allocation7 + $0x78] sm:$0xff]
    %v147 = vld [vmem:[#allocation10 + $0x1] sm:$0x1]
    %v148 = vperm.slane %v147, 0
    %149 = vmatpush.msra.mxu0 %v146
    %150 = vmatpush.msra.mxu0 %v145
    %151 = vmatpush.msra.mxu0 %v144
    %152 = vmatpush.msra.mxu0 %v143
    %153 = vmatpush.msra.mxu0 %v142
    %154 = vmatpush.msra.mxu0 %v141
    %155 = vmatpush.msra.mxu0 %v140
    %156 = vmatpush.msra.mxu0 %v139
    %157 = vmatpush.msra.mxu0 %v138
    %158 = vmatpush.msra.mxu0 %v137
    %159 = vmatpush.msra.mxu0 %v136
    %160 = vmatpush.msra.mxu0 %v135
    %161 = vmatpush.msra.mxu0 %v134
    %162 = vmatpush.msra.mxu0 %v133
    %163 = vmatpush.msra.mxu0 %v132
    %164 = vmatpush.msra.mxu0 %v131
    %165 = vmatmul.f32.gmra.mxu0 %v130
    %v166 = vpop.f32.mrf.mxu0
    %v167 = vadd.f32 %v148, %v166
    %168 = vdwg.mxu0
    %v169 = vmax.f32 %v167, 0.0
    %s170 = scalar_lea.vmem [#allocation7], 128
    %v171 = vld [vmem:[%s170] sm:$0xff]
    %v172 = vld [vmem:[%s170 + $0x8] sm:$0xff]
    %v173 = vld [vmem:[%s170 + $0x10] sm:$0xff]
    %v174 = vld [vmem:[%s170 + $0x18] sm:$0xff]
    %v175 = vld [vmem:[%s170 + $0x20] sm:$0xff]
    %v176 = vld [vmem:[%s170 + $0x28] sm:$0xff]
    %v177 = vld [vmem:[%s170 + $0x30] sm:$0xff]
    %v178 = vld [vmem:[%s170 + $0x38] sm:$0xff]
    %v179 = vld [vmem:[%s170 + $0x40] sm:$0xff]
    %v180 = vld [vmem:[%s170 + $0x48] sm:$0xff]
    %v181 = vld [vmem:[%s170 + $0x50] sm:$0xff]
    %v182 = vld [vmem:[%s170 + $0x58] sm:$0xff]
    %v183 = vld [vmem:[%s170 + $0x60] sm:$0xff]
    %v184 = vld [vmem:[%s170 + $0x68] sm:$0xff]
    %v185 = vld [vmem:[%s170 + $0x70] sm:$0xff]
    %v186 = vld [vmem:[%s170 + $0x78] sm:$0xff]
    %v187 = vld [vmem:[#allocation10 + $0x2] sm:$0x1]
    %v188 = vperm.slane %v187, 0
    %189 = vmatpush.msra.mxu0 %v186
    %190 = vmatpush.msra.mxu0 %v185
    %191 = vmatpush.msra.mxu0 %v184
    %192 = vmatpush.msra.mxu0 %v183
    %193 = vmatpush.msra.mxu0 %v182
    %194 = vmatpush.msra.mxu0 %v181
    %195 = vmatpush.msra.mxu0 %v180
    %196 = vmatpush.msra.mxu0 %v179
    %197 = vmatpush.msra.mxu0 %v178
    %198 = vmatpush.msra.mxu0 %v177
    %199 = vmatpush.msra.mxu0 %v176
    %200 = vmatpush.msra.mxu0 %v175
    %201 = vmatpush.msra.mxu0 %v174
    %202 = vmatpush.msra.mxu0 %v173
    %203 = vmatpush.msra.mxu0 %v172
    %204 = vmatpush.msra.mxu0 %v171
    %205 = vmatmul.f32.gmra.mxu0 %v169
    %v206 = vpop.f32.mrf.mxu0
    %v207 = vadd.f32 %v188, %v206
    %208 = vdwg.mxu0
    %v209 = vmax.f32 %v207, 0.0
    %v210 = vld [vmem:[#allocation8] sm:$0xff]
    %v211 = vld [vmem:[#allocation8 + $0x8] sm:$0xff]
    %v212 = vld [vmem:[#allocation8 + $0x10] sm:$0xff]
    %v213 = vld [vmem:[#allocation8 + $0x18] sm:$0xff]
    %v214 = vld [vmem:[#allocation8 + $0x20] sm:$0xff]
    %v215 = vld [vmem:[#allocation8 + $0x28] sm:$0xff]
    %v216 = vld [vmem:[#allocation8 + $0x30] sm:$0xff]
    %v217 = vld [vmem:[#allocation8 + $0x38] sm:$0xff]
    %v218 = vld [vmem:[#allocation8 + $0x40] sm:$0xff]
    %v219 = vld [vmem:[#allocation8 + $0x48] sm:$0xff]
    %v220 = vld [vmem:[#allocation8 + $0x50] sm:$0xff]
    %v221 = vld [vmem:[#allocation8 + $0x58] sm:$0xff]
    %v222 = vld [vmem:[#allocation8 + $0x60] sm:$0xff]
    %v223 = vld [vmem:[#allocation8 + $0x68] sm:$0xff]
    %v224 = vld [vmem:[#allocation8 + $0x70] sm:$0xff]
    %v225 = vld [vmem:[#allocation8 + $0x78] sm:$0xff]
    %226 = vmatpush.msra.mxu0 %v225
    %227 = vmatpush.msra.mxu0 %v224
    %228 = vmatpush.msra.mxu0 %v223
    %229 = vmatpush.msra.mxu0 %v222
    %230 = vmatpush.msra.mxu0 %v221
    %231 = vmatpush.msra.mxu0 %v220
    %232 = vmatpush.msra.mxu0 %v219
    %233 = vmatpush.msra.mxu0 %v218
    %234 = vmatpush.msra.mxu0 %v217
    %235 = vmatpush.msra.mxu0 %v216
    %236 = vmatpush.msra.mxu0 %v215
    %237 = vmatpush.msra.mxu0 %v214
    %238 = vmatpush.msra.mxu0 %v213
    %239 = vmatpush.msra.mxu0 %v212
    %240 = vmatpush.msra.mxu0 %v211
    %241 = vmatpush.msra.mxu0 %v210
    %242 = vmatmul.f32.gmra.mxu0 %v209
    %v243 = vpop.f32.mrf.mxu0
    %v244 = vadd.f32 0.0, %v243
    %245 = vdwg.mxu0
    %v246 = vld [vmem:[#allocation10 + $0x3] sm:$0x1]
    %v247 = vperm.slane %v246, 0
    %v248 = vadd.f32 %v244, %v247
    %vm249 = vcmask 64512
    %250 = vst.msk [vmem:[#allocation11] sm:$0xff] %vm249, %v248
    // Predicated region
    $region42: #{tpu_custom_call.1} parent=1 // pred_check
      _
    $region43: #{tpu_custom_call.1} parent=1 // pred_check_branch
      %252 = sbr.rel (0) target = $region45
    $region44: #{tpu_custom_call.1} parent=1 // pred_region
      %254 = vsyncadd [#allocation4], 0
      %s256 = sshll.u32 [#allocation11], 4
      %s257 = int_to_ptr.vmem [resolvable:$true] %s256
      %s258 = sshll.u32 %s5, 4
      %s259 = int_to_ptr.hbm [resolvable:$true] %s258
      %261 = dma.vmem_to_hbm [thread:$0]  %s257, 128, %s259, [#allocation4]
    $region45: #{tpu_custom_call.1} parent=1 // pred_fallthru
      _
    // Predicated region
    $region46: #{tpu_custom_call.1} parent=1 // pred_check
      _
    $region47: #{tpu_custom_call.1} parent=1 // pred_check_branch
      %263 = sbr.rel (0) target = $region49
    $region48: #{tpu_custom_call.1} parent=1 // pred_region
      %265 = dma.done [#allocation4], 128
    $region49: #{tpu_custom_call.1} parent=1 // pred_fallthru
      _
    %266 = vsyncpa [#allocation3], 1
    %267 = vsyncpa [#allocation6], 1
    %268 = vsyncpa [#allocation9], 1
    %269 = vsyncpa [#allocation4], 1

</llo_original>
